<compile_context>
chip_gen: v7x
topology: tpu7x:2x2x1
jax: 0.10.0
libtpu: 0.0.40
codegen_flags: <defaults>
</compile_context>

<pallas_src>
import math

import jax
import jax.numpy as jnp
from jax.experimental import pallas as pl
from jax.experimental.pallas import tpu as pltpu


def make_ae_kernel(n_linear_layers, compute_dtype):
    """Kernel running the whole encoder+decoder MLP on one batch tile.

    refs = [x, W0, b0, W1, b1, ..., W{n-1}, b{n-1}, out]
      x   : (D0, TB)      compute_dtype   (features x batch-tile)
      Wi  : (out_i, in_i) compute_dtype
      bi  : (out_i, 1)    float32
      out : (Dn, TB)
    Layer i: h = Wi @ h + bi ; tanh on all layers except the last one
    (AE_basic drops the decoder's trailing Tanh).
    """

    def kernel(*refs):
        x_ref = refs[0]
        o_ref = refs[-1]
        h = x_ref[...]  # (D0, TB) compute_dtype
        for i in range(n_linear_layers):
            w = refs[1 + 2 * i][...]  # (out_i, in_i)
            b = refs[2 + 2 * i][...]  # (out_i, 1) f32, broadcast over lanes
            acc = jnp.dot(w, h, preferred_element_type=jnp.float32) + b
            if i < n_linear_layers - 1:
                # tanh + add in f32 (EUP/VPU); cast back for the next MXU pass.
                h = jnp.tanh(acc).astype(compute_dtype)
            else:
                h = acc
        o_ref[...] = h.astype(o_ref.dtype)

    return kernel


def ae_basic_forward(x, weights, biases, *, batch_tile=512,
                     compute_dtype=jnp.bfloat16, out_dtype=jnp.float32):
    """Fused forward pass of AE_basic.

    x:       (B, nodes[0]) float32
    weights: list of (out_i, in_i) arrays (PyTorch nn.Linear layout)
    biases:  list of (out_i,) arrays
    returns: (B, nodes[-1]) out_dtype
    """
    n_layers = len(weights)
    B, d0 = x.shape
    d_out = int(weights[-1].shape[0])

    # (features, batch) layout: batch on the 128-lane axis.
    x_t = x.T.astype(compute_dtype)

    if B <= batch_tile:
        tb = B                      # single block == full dim (always legal)
        b_pad = B
    else:
        tb = batch_tile             # must be a multiple of 128
        assert tb % 128 == 0
        b_pad = -(-B // tb) * tb
        if b_pad != B:
            x_t = jnp.pad(x_t, ((0, 0), (0, b_pad - B)))

    grid = (b_pad // tb,)

    operands = [x_t]
    in_specs = [pl.BlockSpec((d0, tb), lambda i: (0, i))]
    for w, b in zip(weights, biases):
        w = jnp.asarray(w, compute_dtype)                 # (out, in)
        b = jnp.asarray(b, jnp.float32).reshape(-1, 1)    # (out, 1)
        operands.append(w)
        operands.append(b)
        # Constant index maps -> weights/biases stay resident across steps.
        in_specs.append(pl.BlockSpec(w.shape, lambda i: (0, 0)))
        in_specs.append(pl.BlockSpec(b.shape, lambda i: (0, 0)))

    out_spec = pl.BlockSpec((d_out, tb), lambda i: (0, i))

    # Advisory cost estimate for XLA's scheduler.
    flops = 2 * B * sum(int(w.shape[0]) * int(w.shape[1]) for w in weights)
    transcendentals = B * sum(int(w.shape[0]) for w in weights[:-1])
    bytes_accessed = (
        x_t.size * x_t.dtype.itemsize
        + b_pad * d_out * jnp.dtype(out_dtype).itemsize
        + sum(int(w.size) * jnp.dtype(compute_dtype).itemsize for w in weights)
        + sum(int(jnp.asarray(b).size) * 4 for b in biases)
    )

    kernel = make_ae_kernel(n_layers, compute_dtype)
    out_t = pl.pallas_call(
        kernel,
        out_shape=jax.ShapeDtypeStruct((d_out, b_pad), out_dtype),
        grid=grid,
        in_specs=in_specs,
        out_specs=out_spec,
        compiler_params=pltpu.CompilerParams(
            dimension_semantics=("parallel",),
        ),
        cost_estimate=pl.CostEstimate(
            flops=flops,
            transcendentals=transcendentals,
            bytes_accessed=bytes_accessed,
        ),
    )(*operands)

    return out_t[:, :B].T


def init_ae_params(nodes, key):
    """Deterministic init matching AE_basic's layer structure.

    nodes = [D0, D1, ..., Dn]; n_layers//2 encoder Linears + n_layers//2
    decoder Linears (n_layers = len(nodes)). PyTorch-Linear-style
    U(-1/sqrt(fan_in), 1/sqrt(fan_in)). Weights returned in (out, in) layout,
    biases as (out,).
    """
    n_layers = len(nodes)
    layer_dims = []
    for ii in range(n_layers // 2):
        layer_dims.append((nodes[ii], nodes[ii + 1]))
    for ii in range(n_layers // 2):
        jj = ii + n_layers // 2
        layer_dims.append((nodes[jj], nodes[jj + 1]))

    weights, biases = [], []
    for (ins, outs) in layer_dims:
        key, kw, kb = jax.random.split(key, 3)
        bound = 1.0 / math.sqrt(ins)
        w = jax.random.uniform(kw, (outs, ins), jnp.float32, -bound, bound)
        b = jax.random.uniform(kb, (outs,), jnp.float32, -bound, bound)
        weights.append(w)
        biases.append(b)
    return weights, biases


def ae_basic_reference(x, weights, biases, compute_dtype=jnp.float32):
    """Pure-JAX reference mirroring the PyTorch forward.

    When compute_dtype=bf16 it matches the kernel's quantization (bf16
    matmul operands, f32 accumulation, f32 tanh).
    """
    h = x.astype(compute_dtype)
    n = len(weights)
    for i, (w, b) in enumerate(zip(weights, biases)):
        w = jnp.asarray(w, compute_dtype)
        acc = jnp.dot(h, w.T, preferred_element_type=jnp.float32)
        acc = acc + jnp.asarray(b, jnp.float32).reshape(1, -1)
        if i < n - 1:
            h = jnp.tanh(acc).astype(compute_dtype)
        else:
            h = acc
    return h.astype(jnp.float32)


if __name__ == "__main__":
    # Small symmetric autoencoder: 32 -> 16 -> 8 -> 16 -> 32
    nodes = [32, 16, 8, 16, 32]

    key = jax.random.PRNGKey(0)
    key, kx1, kx2 = jax.random.split(key, 3)
    weights, biases = init_ae_params(nodes, key)

    # Case 1: batch tiled across multiple grid steps (B > batch_tile).
    b1 = 256
    x1 = jax.random.normal(kx1, (b1, nodes[0]), jnp.float32)
    out1 = ae_basic_forward(x1, weights, biases, batch_tile=128)
    out1 = jax.block_until_ready(out1)
    assert out1.shape == (b1, nodes[-1])
    ref1_bf16 = ae_basic_reference(x1, weights, biases, jnp.bfloat16)
    ref1_f32 = ae_basic_reference(x1, weights, biases, jnp.float32)
    assert jnp.allclose(out1, ref1_bf16, atol=2e-3, rtol=2e-3), \
        "mismatch vs bf16-matched reference (case 1)"
    assert jnp.allclose(out1, ref1_f32, atol=5e-2, rtol=5e-2), \
        "mismatch vs f32 reference (case 1)"

    # Case 2: small, non-aligned batch (single full-dim block path).
    b2 = 10
    x2 = jax.random.normal(kx2, (b2, nodes[0]), jnp.float32)
    out2 = ae_basic_forward(x2, weights, biases)
    out2 = jax.block_until_ready(out2)
    assert out2.shape == (b2, nodes[-1])
    ref2_bf16 = ae_basic_reference(x2, weights, biases, jnp.bfloat16)
    assert jnp.allclose(out2, ref2_bf16, atol=2e-3, rtol=2e-3), \
        "mismatch vs bf16-matched reference (case 2)"

    print("KERNEL_OK")
</pallas_src>

<mosaic_0001>
module attributes {stable_mosaic.version = 11 : i64} {
  func.func @kernel(%arg0: i32, %arg1: memref<32x128xbf16, #tpu.memory_space<vmem>>, %arg2: memref<16x32xbf16, #tpu.memory_space<vmem>>, %arg3: memref<16x1xf32, #tpu.memory_space<vmem>>, %arg4: memref<8x16xbf16, #tpu.memory_space<vmem>>, %arg5: memref<8x1xf32, #tpu.memory_space<vmem>>, %arg6: memref<16x8xbf16, #tpu.memory_space<vmem>>, %arg7: memref<16x1xf32, #tpu.memory_space<vmem>>, %arg8: memref<32x16xbf16, #tpu.memory_space<vmem>>, %arg9: memref<32x1xf32, #tpu.memory_space<vmem>>, %arg10: memref<32x128xf32, #tpu.memory_space<vmem>>) attributes {dimension_semantics = [#tpu.dimension_semantics<parallel>], iteration_bounds = array<i64: 2>, scalar_prefetch = 0 : i64, scratch_operands = 0 : i64, tpu.core_type = #tpu.core_type<tc>, window_params = [{transform_indices = @transform_0, window_bounds = array<i64: 32, 128>}, {pipeline_mode = #tpu.pipeline_mode<synchronous>, transform_indices = @transform_1, window_bounds = array<i64: 16, 32>}, {pipeline_mode = #tpu.pipeline_mode<synchronous>, transform_indices = @transform_2, window_bounds = array<i64: 16, 1>}, {pipeline_mode = #tpu.pipeline_mode<synchronous>, transform_indices = @transform_3, window_bounds = array<i64: 8, 16>}, {pipeline_mode = #tpu.pipeline_mode<synchronous>, transform_indices = @transform_4, window_bounds = array<i64: 8, 1>}, {pipeline_mode = #tpu.pipeline_mode<synchronous>, transform_indices = @transform_5, window_bounds = array<i64: 16, 8>}, {pipeline_mode = #tpu.pipeline_mode<synchronous>, transform_indices = @transform_6, window_bounds = array<i64: 16, 1>}, {pipeline_mode = #tpu.pipeline_mode<synchronous>, transform_indices = @transform_7, window_bounds = array<i64: 32, 16>}, {pipeline_mode = #tpu.pipeline_mode<synchronous>, transform_indices = @transform_8, window_bounds = array<i64: 32, 1>}, {transform_indices = @transform_9, window_bounds = array<i64: 32, 128>}]} {
    %c0 = arith.constant 0 : index
    %c0_0 = arith.constant 0 : index
    %0 = vector.load %arg1[%c0, %c0_0] : memref<32x128xbf16, #tpu.memory_space<vmem>>, vector<32x128xbf16>
    %c0_1 = arith.constant 0 : index
    %c0_2 = arith.constant 0 : index
    %1 = vector.load %arg2[%c0_1, %c0_2] : memref<16x32xbf16, #tpu.memory_space<vmem>>, vector<16x32xbf16>
    %c0_3 = arith.constant 0 : index
    %c0_4 = arith.constant 0 : index
    %2 = vector.load %arg3[%c0_3, %c0_4] : memref<16x1xf32, #tpu.memory_space<vmem>>, vector<16x1xf32>
    %cst = arith.constant dense<0.000000e+00> : vector<16x128xf32>
    %3 = tpu.matmul %1, %0, %cst {dimension_numbers = #tpu.dot_dimension_numbers<[1], [0], [0], [1], [0, 0, 1, 1], [], []>} : vector<16x32xbf16>, vector<32x128xbf16>, vector<16x128xf32> -> vector<16x128xf32>
    %4 = vector.broadcast %2 : vector<16x1xf32> to vector<16x128xf32>
    %5 = arith.addf %3, %4 : vector<16x128xf32>
    %6 = math.tanh %5 : vector<16x128xf32>
    %7 = arith.truncf %6 : vector<16x128xf32> to vector<16x128xbf16>
    %c0_5 = arith.constant 0 : index
    %c0_6 = arith.constant 0 : index
    %8 = vector.load %arg4[%c0_5, %c0_6] : memref<8x16xbf16, #tpu.memory_space<vmem>>, vector<8x16xbf16>
    %c0_7 = arith.constant 0 : index
    %c0_8 = arith.constant 0 : index
    %9 = vector.load %arg5[%c0_7, %c0_8] : memref<8x1xf32, #tpu.memory_space<vmem>>, vector<8x1xf32>
    %cst_9 = arith.constant dense<0.000000e+00> : vector<8x128xf32>
    %10 = tpu.matmul %8, %7, %cst_9 {dimension_numbers = #tpu.dot_dimension_numbers<[1], [0], [0], [1], [0, 0, 1, 1], [], []>} : vector<8x16xbf16>, vector<16x128xbf16>, vector<8x128xf32> -> vector<8x128xf32>
    %11 = vector.broadcast %9 : vector<8x1xf32> to vector<8x128xf32>
    %12 = arith.addf %10, %11 : vector<8x128xf32>
    %13 = math.tanh %12 : vector<8x128xf32>
    %14 = arith.truncf %13 : vector<8x128xf32> to vector<8x128xbf16>
    %c0_10 = arith.constant 0 : index
    %c0_11 = arith.constant 0 : index
    %15 = vector.load %arg6[%c0_10, %c0_11] : memref<16x8xbf16, #tpu.memory_space<vmem>>, vector<16x8xbf16>
    %c0_12 = arith.constant 0 : index
    %c0_13 = arith.constant 0 : index
    %16 = vector.load %arg7[%c0_12, %c0_13] : memref<16x1xf32, #tpu.memory_space<vmem>>, vector<16x1xf32>
    %cst_14 = arith.constant dense<0.000000e+00> : vector<16x128xf32>
    %17 = tpu.matmul %15, %14, %cst_14 {dimension_numbers = #tpu.dot_dimension_numbers<[1], [0], [0], [1], [0, 0, 1, 1], [], []>} : vector<16x8xbf16>, vector<8x128xbf16>, vector<16x128xf32> -> vector<16x128xf32>
    %18 = vector.broadcast %16 : vector<16x1xf32> to vector<16x128xf32>
    %19 = arith.addf %17, %18 : vector<16x128xf32>
    %20 = math.tanh %19 : vector<16x128xf32>
    %21 = arith.truncf %20 : vector<16x128xf32> to vector<16x128xbf16>
    %c0_15 = arith.constant 0 : index
    %c0_16 = arith.constant 0 : index
    %22 = vector.load %arg8[%c0_15, %c0_16] : memref<32x16xbf16, #tpu.memory_space<vmem>>, vector<32x16xbf16>
    %c0_17 = arith.constant 0 : index
    %c0_18 = arith.constant 0 : index
    %23 = vector.load %arg9[%c0_17, %c0_18] : memref<32x1xf32, #tpu.memory_space<vmem>>, vector<32x1xf32>
    %cst_19 = arith.constant dense<0.000000e+00> : vector<32x128xf32>
    %24 = tpu.matmul %22, %21, %cst_19 {dimension_numbers = #tpu.dot_dimension_numbers<[1], [0], [0], [1], [0, 0, 1, 1], [], []>} : vector<32x16xbf16>, vector<16x128xbf16>, vector<32x128xf32> -> vector<32x128xf32>
    %25 = vector.broadcast %23 : vector<32x1xf32> to vector<32x128xf32>
    %26 = arith.addf %24, %25 : vector<32x128xf32>
    %c0_20 = arith.constant 0 : index
    %c0_21 = arith.constant 0 : index
    %27 = vector.load %arg10[%c0_20, %c0_21] : memref<32x128xf32, #tpu.memory_space<vmem>>, vector<32x128xf32>
    tpu.vector_store %arg10[%c0_20, %c0_21], %26 {strides = array<i32>} : memref<32x128xf32, #tpu.memory_space<vmem>>, vector<32x128xf32>,
    return
  }
  func.func @transform_0(%arg0: i32) -> (i32, i32) {
    %c0_i32 = arith.constant 0 : i32
    %c0_i32_0 = arith.constant 0 : i32
    return %c0_i32, %arg0 : i32, i32
  }
  func.func @transform_1(%arg0: i32) -> (i32, i32) {
    %c0_i32 = arith.constant 0 : i32
    %c0_i32_0 = arith.constant 0 : i32
    %c0_i32_1 = arith.constant 0 : i32
    return %c0_i32, %c0_i32_0 : i32, i32
  }
  func.func @transform_2(%arg0: i32) -> (i32, i32) {
    %c0_i32 = arith.constant 0 : i32
    %c0_i32_0 = arith.constant 0 : i32
    %c0_i32_1 = arith.constant 0 : i32
    return %c0_i32, %c0_i32_0 : i32, i32
  }
  func.func @transform_3(%arg0: i32) -> (i32, i32) {
    %c0_i32 = arith.constant 0 : i32
    %c0_i32_0 = arith.constant 0 : i32
    %c0_i32_1 = arith.constant 0 : i32
    return %c0_i32, %c0_i32_0 : i32, i32
  }
  func.func @transform_4(%arg0: i32) -> (i32, i32) {
    %c0_i32 = arith.constant 0 : i32
    %c0_i32_0 = arith.constant 0 : i32
    %c0_i32_1 = arith.constant 0 : i32
    return %c0_i32, %c0_i32_0 : i32, i32
  }
  func.func @transform_5(%arg0: i32) -> (i32, i32) {
    %c0_i32 = arith.constant 0 : i32
    %c0_i32_0 = arith.constant 0 : i32
    %c0_i32_1 = arith.constant 0 : i32
    return %c0_i32, %c0_i32_0 : i32, i32
  }
  func.func @transform_6(%arg0: i32) -> (i32, i32) {
    %c0_i32 = arith.constant 0 : i32
    %c0_i32_0 = arith.constant 0 : i32
    %c0_i32_1 = arith.constant 0 : i32
    return %c0_i32, %c0_i32_0 : i32, i32
  }
  func.func @transform_7(%arg0: i32) -> (i32, i32) {
    %c0_i32 = arith.constant 0 : i32
    %c0_i32_0 = arith.constant 0 : i32
    %c0_i32_1 = arith.constant 0 : i32
    return %c0_i32, %c0_i32_0 : i32, i32
  }
  func.func @transform_8(%arg0: i32) -> (i32, i32) {
    %c0_i32 = arith.constant 0 : i32
    %c0_i32_0 = arith.constant 0 : i32
    %c0_i32_1 = arith.constant 0 : i32
    return %c0_i32, %c0_i32_0 : i32, i32
  }
  func.func @transform_9(%arg0: i32) -> (i32, i32) {
    %c0_i32 = arith.constant 0 : i32
    %c0_i32_0 = arith.constant 0 : i32
    return %c0_i32, %arg0 : i32, i32
  }
}

</mosaic_0001>

<llo_original>
// kernel: tpu_custom_call.1
$region0: #{tpu_custom_call.1}
  #allocation0 [shape = 'u32[]', space=smem, size = 0x4, offset = 0x4, fixed_abs, tag = 'smem constant byte address 0x4 - core index']
  #allocation1 [shape = 'u32[144,128]{1,0:T(1,128)}', space=vmem, size = 0x12000, scoped, tag = 'internal scratch']
  %s0 = inlined_call_operand.vmem [shape: bf16[32,256], index: 0, kind: input, shape index: {}]
  %s1 = inlined_call_operand.vmem [shape: bf16[16,32], index: 1, kind: input, shape index: {}]
  %s2 = inlined_call_operand.vmem [shape: f32[16,1], index: 2, kind: input, shape index: {}]
  %s3 = inlined_call_operand.vmem [shape: bf16[8,16], index: 3, kind: input, shape index: {}]
  %s4 = inlined_call_operand.vmem [shape: f32[8,1], index: 4, kind: input, shape index: {}]
  %s5 = inlined_call_operand.vmem [shape: bf16[16,8], index: 5, kind: input, shape index: {}]
  %s6 = inlined_call_operand.vmem [shape: f32[16,1], index: 6, kind: input, shape index: {}]
  %s7 = inlined_call_operand.vmem [shape: bf16[32,16], index: 7, kind: input, shape index: {}]
  %s8 = inlined_call_operand.vmem [shape: f32[32,1], index: 8, kind: input, shape index: {}]
  %s9 = inlined_call_operand.hbm [shape: f32[32,256], index: 9, kind: output, shape index: {}]
  %s10 = sld [smem:[#allocation0]]
  $region110: #{tpu_custom_call.1} parent=0
    _
  %s12 = ssub.s32 1, %s10
  %s13 = scalar_select 0, %s12, %s10
  $region1: #{tpu_custom_call.1} parent=0
    #allocation2 [shape = 'u8[16384]{0}', space=vmem, size = 0x4000, scoped, tag = 'input window, operand 0']
    #allocation3 [shape = 'u8[32768]{0}', space=vmem, size = 0x8000, scoped, tag = 'output window, operand 0']
    #allocation4 [shape = 's32[2]{0}', space=sflag, size = 0x8, scoped, tag = 'scoped memory for tpu_custom_call.1']
    %14 = vsyncpa [#allocation4], 0
    %s15 = scalar_lea.sflag [#allocation4], 1
    %16 = vsyncpa %s15, 0
    loop: start=0, step=1, limit=4
    $region2: #{tpu_custom_call.1} parent=1 // loop_pre_header
      _
    $region3: #{tpu_custom_call.1} parent=1 // loop_header
      %s18 = sphi 0, %s22
      %p19 = scmp.ge.s32.totalorder %s18, 4
      %s28 = sphi 0, %s30
      %s31 = sphi 0, %s28
      %s32 = sphi 0, %s31
      %s48 = sphi 0, %s32
      %s52 = sphi 0, %s52
      %s54 = sphi 0, %s52
      %s55 = sphi 0, %s54
      %s69 = sphi 0, %s55
      %s73 = sphi 0, %s73
      %s75 = sphi 0, %s73
      %s76 = sphi 0, %s75
      %s90 = sphi 0, %s76
      %s94 = sphi 0, %s94
      %s96 = sphi 0, %s94
      %s97 = sphi 0, %s96
      %s111 = sphi 0, %s97
      %s115 = sphi 0, %s115
      %s117 = sphi 0, %s115
      %s118 = sphi 0, %s117
      %s132 = sphi 0, %s118
      %s136 = sphi 0, %s136
      %s138 = sphi 0, %s136
      %s139 = sphi 0, %s138
      %s153 = sphi 0, %s139
      %s157 = sphi 0, %s157
      %s159 = sphi 0, %s157
      %s160 = sphi 0, %s159
      %s174 = sphi 0, %s160
      %s178 = sphi 0, %s178
      %s180 = sphi 0, %s178
      %s181 = sphi 0, %s180
      %s195 = sphi 0, %s181
      %s199 = sphi 0, %s199
      %s201 = sphi 0, %s199
      %s202 = sphi 0, %s201
      %s216 = sphi 0, %s202
      %s222 = sphi 0, %s224
      %s225 = sphi 0, %s222
      %s226 = sphi 0, %s225
      %s242 = sphi 0, %s226
    $region4: #{tpu_custom_call.1} parent=1 // loop_header_branch
      %21 = sbr.rel (%p19) target = $region8
    $region5: #{tpu_custom_call.1} parent=1 // loop_body
      %s23 = ssub.s32 %s18, 1
      %s24 = ssub.s32 %s18, 2
      %s25 = sadd.s32 %s18, 1
      %s26 = ssub.s32 %s18, %s25
      %p27 = scmp.eq.s32.totalorder %s26, 0
      %s29 = sadd.s32 %s28, 1
      %s30 = scalar_select %p27, %s28, %s29
      %p33 = pneg %p27
      %p34 = scmp.eq.s32.totalorder %s18, 1
      %p35 = por %p33, %p34
      %p36 = scmp.ne.s32.totalorder %s28, %s31
      %p37 = scmp.eq.s32.totalorder %s18, 0
      %p38 = por %p36, %p37
      %p39 = scmp.ne.s32.totalorder %s28, %s31
      %p40 = scmp.eq.s32.totalorder %s23, 1
      %p41 = por %p39, %p40
      %p42 = scmp.ne.s32.totalorder %s31, %s32
      %p43 = scmp.eq.s32.totalorder %s23, 0
      %p44 = por %p42, %p43
      %p45 = scmp.ne.s32.totalorder %s31, %s32
      %p46 = scmp.eq.s32.totalorder %s24, 1
      %p47 = por %p45, %p46
      %p49 = scmp.ne.s32.totalorder %s32, %s48
      %p50 = scmp.eq.s32.totalorder %s24, 0
      %p51 = por %p49, %p50
      %s53 = sadd.s32 %s52, 1
      %p56 = scmp.eq.s32.totalorder %s18, 1
      %p57 = scmp.ne.s32.totalorder %s52, %s54
      %p58 = scmp.eq.s32.totalorder %s18, 0
      %p59 = por %p57, %p58
      %p60 = scmp.ne.s32.totalorder %s52, %s54
      %p61 = scmp.eq.s32.totalorder %s23, 1
      %p62 = por %p60, %p61
      %p63 = scmp.ne.s32.totalorder %s54, %s55
      %p64 = scmp.eq.s32.totalorder %s23, 0
      %p65 = por %p63, %p64
      %p66 = scmp.ne.s32.totalorder %s54, %s55
      %p67 = scmp.eq.s32.totalorder %s24, 1
      %p68 = por %p66, %p67
      %p70 = scmp.ne.s32.totalorder %s55, %s69
      %p71 = scmp.eq.s32.totalorder %s24, 0
      %p72 = por %p70, %p71
      %s74 = sadd.s32 %s73, 1
      %p77 = scmp.eq.s32.totalorder %s18, 1
      %p78 = scmp.ne.s32.totalorder %s73, %s75
      %p79 = scmp.eq.s32.totalorder %s18, 0
      %p80 = por %p78, %p79
      %p81 = scmp.ne.s32.totalorder %s73, %s75
      %p82 = scmp.eq.s32.totalorder %s23, 1
      %p83 = por %p81, %p82
      %p84 = scmp.ne.s32.totalorder %s75, %s76
      %p85 = scmp.eq.s32.totalorder %s23, 0
      %p86 = por %p84, %p85
      %p87 = scmp.ne.s32.totalorder %s75, %s76
      %p88 = scmp.eq.s32.totalorder %s24, 1
      %p89 = por %p87, %p88
      %p91 = scmp.ne.s32.totalorder %s76, %s90
      %p92 = scmp.eq.s32.totalorder %s24, 0
      %p93 = por %p91, %p92
      %s95 = sadd.s32 %s94, 1
      %p98 = scmp.eq.s32.totalorder %s18, 1
      %p99 = scmp.ne.s32.totalorder %s94, %s96
      %p100 = scmp.eq.s32.totalorder %s18, 0
      %p101 = por %p99, %p100
      %p102 = scmp.ne.s32.totalorder %s94, %s96
      %p103 = scmp.eq.s32.totalorder %s23, 1
      %p104 = por %p102, %p103
      %p105 = scmp.ne.s32.totalorder %s96, %s97
      %p106 = scmp.eq.s32.totalorder %s23, 0
      %p107 = por %p105, %p106
      %p108 = scmp.ne.s32.totalorder %s96, %s97
      %p109 = scmp.eq.s32.totalorder %s24, 1
      %p110 = por %p108, %p109
      %p112 = scmp.ne.s32.totalorder %s97, %s111
      %p113 = scmp.eq.s32.totalorder %s24, 0
      %p114 = por %p112, %p113
      %s116 = sadd.s32 %s115, 1
      %p119 = scmp.eq.s32.totalorder %s18, 1
      %p120 = scmp.ne.s32.totalorder %s115, %s117
      %p121 = scmp.eq.s32.totalorder %s18, 0
      %p122 = por %p120, %p121
      %p123 = scmp.ne.s32.totalorder %s115, %s117
      %p124 = scmp.eq.s32.totalorder %s23, 1
      %p125 = por %p123, %p124
      %p126 = scmp.ne.s32.totalorder %s117, %s118
      %p127 = scmp.eq.s32.totalorder %s23, 0
      %p128 = por %p126, %p127
      %p129 = scmp.ne.s32.totalorder %s117, %s118
      %p130 = scmp.eq.s32.totalorder %s24, 1
      %p131 = por %p129, %p130
      %p133 = scmp.ne.s32.totalorder %s118, %s132
      %p134 = scmp.eq.s32.totalorder %s24, 0
      %p135 = por %p133, %p134
      %s137 = sadd.s32 %s136, 1
      %p140 = scmp.eq.s32.totalorder %s18, 1
      %p141 = scmp.ne.s32.totalorder %s136, %s138
      %p142 = scmp.eq.s32.totalorder %s18, 0
      %p143 = por %p141, %p142
      %p144 = scmp.ne.s32.totalorder %s136, %s138
      %p145 = scmp.eq.s32.totalorder %s23, 1
      %p146 = por %p144, %p145
      %p147 = scmp.ne.s32.totalorder %s138, %s139
      %p148 = scmp.eq.s32.totalorder %s23, 0
      %p149 = por %p147, %p148
      %p150 = scmp.ne.s32.totalorder %s138, %s139
      %p151 = scmp.eq.s32.totalorder %s24, 1
      %p152 = por %p150, %p151
      %p154 = scmp.ne.s32.totalorder %s139, %s153
      %p155 = scmp.eq.s32.totalorder %s24, 0
      %p156 = por %p154, %p155
      %s158 = sadd.s32 %s157, 1
      %p161 = scmp.eq.s32.totalorder %s18, 1
      %p162 = scmp.ne.s32.totalorder %s157, %s159
      %p163 = scmp.eq.s32.totalorder %s18, 0
      %p164 = por %p162, %p163
      %p165 = scmp.ne.s32.totalorder %s157, %s159
      %p166 = scmp.eq.s32.totalorder %s23, 1
      %p167 = por %p165, %p166
      %p168 = scmp.ne.s32.totalorder %s159, %s160
      %p169 = scmp.eq.s32.totalorder %s23, 0
      %p170 = por %p168, %p169
      %p171 = scmp.ne.s32.totalorder %s159, %s160
      %p172 = scmp.eq.s32.totalorder %s24, 1
      %p173 = por %p171, %p172
      %p175 = scmp.ne.s32.totalorder %s160, %s174
      %p176 = scmp.eq.s32.totalorder %s24, 0
      %p177 = por %p175, %p176
      %s179 = sadd.s32 %s178, 1
      %p182 = scmp.eq.s32.totalorder %s18, 1
      %p183 = scmp.ne.s32.totalorder %s178, %s180
      %p184 = scmp.eq.s32.totalorder %s18, 0
      %p185 = por %p183, %p184
      %p186 = scmp.ne.s32.totalorder %s178, %s180
      %p187 = scmp.eq.s32.totalorder %s23, 1
      %p188 = por %p186, %p187
      %p189 = scmp.ne.s32.totalorder %s180, %s181
      %p190 = scmp.eq.s32.totalorder %s23, 0
      %p191 = por %p189, %p190
      %p192 = scmp.ne.s32.totalorder %s180, %s181
      %p193 = scmp.eq.s32.totalorder %s24, 1
      %p194 = por %p192, %p193
      %p196 = scmp.ne.s32.totalorder %s181, %s195
      %p197 = scmp.eq.s32.totalorder %s24, 0
      %p198 = por %p196, %p197
      %s200 = sadd.s32 %s199, 1
      %p203 = scmp.eq.s32.totalorder %s18, 1
      %p204 = scmp.ne.s32.totalorder %s199, %s201
      %p205 = scmp.eq.s32.totalorder %s18, 0
      %p206 = por %p204, %p205
      %p207 = scmp.ne.s32.totalorder %s199, %s201
      %p208 = scmp.eq.s32.totalorder %s23, 1
      %p209 = por %p207, %p208
      %p210 = scmp.ne.s32.totalorder %s201, %s202
      %p211 = scmp.eq.s32.totalorder %s23, 0
      %p212 = por %p210, %p211
      %p213 = scmp.ne.s32.totalorder %s201, %s202
      %p214 = scmp.eq.s32.totalorder %s24, 1
      %p215 = por %p213, %p214
      %p217 = scmp.ne.s32.totalorder %s202, %s216
      %p218 = scmp.eq.s32.totalorder %s24, 0
      %p219 = por %p217, %p218
      %s220 = ssub.s32 %s18, %s25
      %p221 = scmp.eq.s32.totalorder %s220, 0
      %s223 = sadd.s32 %s222, 1
      %s224 = scalar_select %p221, %s222, %s223
      %p227 = pneg %p221
      %p228 = scmp.eq.s32.totalorder %s18, 1
      %p229 = por %p227, %p228
      %p230 = scmp.ne.s32.totalorder %s222, %s225
      %p231 = scmp.eq.s32.totalorder %s18, 0
      %p232 = por %p230, %p231
      %p233 = scmp.ne.s32.totalorder %s222, %s225
      %p234 = scmp.eq.s32.totalorder %s23, 1
      %p235 = por %p233, %p234
      %p236 = scmp.ne.s32.totalorder %s225, %s226
      %p237 = scmp.eq.s32.totalorder %s23, 0
      %p238 = por %p236, %p237
      %p239 = scmp.ne.s32.totalorder %s225, %s226
      %p240 = scmp.eq.s32.totalorder %s24, 1
      %p241 = por %p239, %p240
      %p243 = scmp.ne.s32.totalorder %s226, %s242
      %p244 = scmp.eq.s32.totalorder %s24, 0
      %p245 = por %p243, %p244
      %p246 = scmp.le.s32.totalorder 1, %s18
      %p247 = scmp.lt.s32.totalorder %s18, 3
      %p248 = pnand %p246, %p247
      %p249 = pneg %p248
      // Predicated region
      $region9: #{tpu_custom_call.1} parent=5 // pred_check
        _
      $region10: #{tpu_custom_call.1} parent=5 // pred_check_branch
        %251 = sbr.rel (%p248) target = $region12
      $region11: #{tpu_custom_call.1} parent=5 // pred_region
        %s252 = ssub.s32 %s18, 1
        // Predicated region
        $region13: #{tpu_custom_call.1} parent=11 // pred_check
          %p253 = pneg %p65
        $region14: #{tpu_custom_call.1} parent=11 // pred_check_branch
          %255 = sbr.rel (%p253) target = $region16
        $region15: #{tpu_custom_call.1} parent=11 // pred_region
          _
        $region16: #{tpu_custom_call.1} parent=11 // pred_fallthru
          _
        // Predicated region
        $region17: #{tpu_custom_call.1} parent=11 // pred_check
          %p256 = pneg %p86
        $region18: #{tpu_custom_call.1} parent=11 // pred_check_branch
          %258 = sbr.rel (%p256) target = $region20
        $region19: #{tpu_custom_call.1} parent=11 // pred_region
          _
        $region20: #{tpu_custom_call.1} parent=11 // pred_fallthru
          _
        // Predicated region
        $region21: #{tpu_custom_call.1} parent=11 // pred_check
          %p259 = pneg %p107
        $region22: #{tpu_custom_call.1} parent=11 // pred_check_branch
          %261 = sbr.rel (%p259) target = $region24
        $region23: #{tpu_custom_call.1} parent=11 // pred_region
          _
        $region24: #{tpu_custom_call.1} parent=11 // pred_fallthru
          _
        // Predicated region
        $region25: #{tpu_custom_call.1} parent=11 // pred_check
          %p262 = pneg %p128
        $region26: #{tpu_custom_call.1} parent=11 // pred_check_branch
          %264 = sbr.rel (%p262) target = $region28
        $region27: #{tpu_custom_call.1} parent=11 // pred_region
          _
        $region28: #{tpu_custom_call.1} parent=11 // pred_fallthru
          _
        // Predicated region
        $region29: #{tpu_custom_call.1} parent=11 // pred_check
          %p265 = pneg %p149
        $region30: #{tpu_custom_call.1} parent=11 // pred_check_branch
          %267 = sbr.rel (%p265) target = $region32
        $region31: #{tpu_custom_call.1} parent=11 // pred_region
          _
        $region32: #{tpu_custom_call.1} parent=11 // pred_fallthru
          _
        // Predicated region
        $region33: #{tpu_custom_call.1} parent=11 // pred_check
          %p268 = pneg %p170
        $region34: #{tpu_custom_call.1} parent=11 // pred_check_branch
          %270 = sbr.rel (%p268) target = $region36
        $region35: #{tpu_custom_call.1} parent=11 // pred_region
          _
        $region36: #{tpu_custom_call.1} parent=11 // pred_fallthru
          _
        // Predicated region
        $region37: #{tpu_custom_call.1} parent=11 // pred_check
          %p271 = pneg %p191
        $region38: #{tpu_custom_call.1} parent=11 // pred_check_branch
          %273 = sbr.rel (%p271) target = $region40
        $region39: #{tpu_custom_call.1} parent=11 // pred_region
          _
        $region40: #{tpu_custom_call.1} parent=11 // pred_fallthru
          _
        // Predicated region
        $region41: #{tpu_custom_call.1} parent=11 // pred_check
          %p274 = pneg %p212
        $region42: #{tpu_custom_call.1} parent=11 // pred_check_branch
          %276 = sbr.rel (%p274) target = $region44
        $region43: #{tpu_custom_call.1} parent=11 // pred_region
          _
        $region44: #{tpu_custom_call.1} parent=11 // pred_fallthru
          _
      $region12: #{tpu_custom_call.1} parent=5 // pred_fallthru
        _
      %p277 = scmp.lt.s32.totalorder %s18, 2
      // Predicated region
      $region45: #{tpu_custom_call.1} parent=5 // pred_check
        %p278 = pneg %p277
      $region46: #{tpu_custom_call.1} parent=5 // pred_check_branch
        %280 = sbr.rel (%p278) target = $region48
      $region47: #{tpu_custom_call.1} parent=5 // pred_region
        // Predicated region
        $region49: #{tpu_custom_call.1} parent=47 // pred_check
          %p281 = pneg %p38
        $region50: #{tpu_custom_call.1} parent=47 // pred_check_branch
          %283 = sbr.rel (%p281) target = $region52
        $region51: #{tpu_custom_call.1} parent=47 // pred_region
          %s284 = sand.u32 %s28, 1
          %s285 = sand.u32 %s28, 1
          %s286 = smul.addr %s285, 16
          %s287 = scalar_lea.vmem [#allocation2], %s286
          %s288 = smul.addr %s18, 4
          %s289 = scalar_lea.vmem %s0, %s288
          // Predicated region
          $region53: #{tpu_custom_call.1} parent=51 // pred_check
            _
          $region54: #{tpu_custom_call.1} parent=51 // pred_check_branch
            %291 = sbr.rel (0) target = $region56
          $region55: #{tpu_custom_call.1} parent=51 // pred_region
            // Predicated region
            $region57: #{tpu_custom_call.1} parent=55 // pred_check
              _
            $region58: #{tpu_custom_call.1} parent=55 // pred_check_branch
              %293 = sbr.rel target = $region60
            $region59: #{tpu_custom_call.1} parent=55 // pred_region
              // Predicated region
              $region72: #{tpu_custom_call.1} parent=59 // pred_check
                _
              $region73: #{tpu_custom_call.1} parent=59 // pred_check_branch
                %314 = sbr.rel (0) target = $region75
              $region74: #{tpu_custom_call.1} parent=59 // pred_region
                loop: start=0, step=1, limit=1
                $region76: #{tpu_custom_call.1} parent=74 // loop_pre_header
                  _
                $region77: #{tpu_custom_call.1} parent=74 // loop_header
                  %s316 = sphi 0, %s320
                  %p317 = scmp.ge.s32.totalorder %s316, 1
                  %s321 = sphi %s289, %s289
                  %s322 = sphi %s287, %s287
                $region78: #{tpu_custom_call.1} parent=74 // loop_header_branch
                  %319 = sbr.rel (%p317) target = $region82
                $region79: #{tpu_custom_call.1} parent=74 // loop_body
                  _
                $region80: #{tpu_custom_call.1} parent=74 // loop_footer
                  %s320 = sadd.s32 1, %s316
                $region81: #{tpu_custom_call.1} parent=74 // loop_footer_branch
                  %315 = sbr.rel target = $region77
                $region82: #{tpu_custom_call.1} parent=74 // loop_exit
                  _
                loop: start=0, step=1, limit=1
                $region83: #{tpu_custom_call.1} parent=74 // loop_pre_header
                  _
                $region84: #{tpu_custom_call.1} parent=74 // loop_header
                  %s325 = sphi 0, %s329
                  %p326 = scmp.ge.s32.totalorder %s325, 1
                  %s330 = sphi %s289, %s289
                  %s331 = sphi %s287, %s287
                $region85: #{tpu_custom_call.1} parent=74 // loop_header_branch
                  %328 = sbr.rel (%p326) target = $region89
                $region86: #{tpu_custom_call.1} parent=74 // loop_body
                  %v332 = vld [vmem:[%s330] sm:$0xf]
                  %333 = vst [vmem:[%s331] sm:$0xf] %v332
                  %v334 = vld [vmem:[%s330 + $0x8] sm:$0xf]
                  %335 = vst [vmem:[%s331 + $0x4] sm:$0xf] %v334
                  %v336 = vld [vmem:[%s330 + $0x10] sm:$0xf]
                  %337 = vst [vmem:[%s331 + $0x8] sm:$0xf] %v336
                  %v338 = vld [vmem:[%s330 + $0x18] sm:$0xf]
                  %339 = vst [vmem:[%s331 + $0xc] sm:$0xf] %v338
                $region87: #{tpu_custom_call.1} parent=74 // loop_footer
                  %s329 = sadd.s32 1, %s325
                $region88: #{tpu_custom_call.1} parent=74 // loop_footer_branch
                  %324 = sbr.rel target = $region84
                $region89: #{tpu_custom_call.1} parent=74 // loop_exit
                  _
              $region75: #{tpu_custom_call.1} parent=59 // pred_fallthru
                _
            $region60: #{tpu_custom_call.1} parent=55 // pred_fallthru
              _
            // Predicated region
            $region61: #{tpu_custom_call.1} parent=55 // pred_check
              _
            $region62: #{tpu_custom_call.1} parent=55 // pred_check_branch
              %295 = sbr.rel (0) target = $region64
            $region63: #{tpu_custom_call.1} parent=55 // pred_region
              loop: start=0, step=1, limit=1
              $region65: #{tpu_custom_call.1} parent=63 // loop_pre_header
                _
              $region66: #{tpu_custom_call.1} parent=63 // loop_header
                %s298 = sphi 0, %s302
                %p299 = scmp.ge.s32.totalorder %s298, 1
                %s303 = sphi %s289, %s289
                %s304 = sphi %s287, %s287
              $region67: #{tpu_custom_call.1} parent=63 // loop_header_branch
                %301 = sbr.rel (%p299) target = $region71
              $region68: #{tpu_custom_call.1} parent=63 // loop_body
                %v305 = vld [vmem:[%s303] sm:$0xf]
                %306 = vst [vmem:[%s304] sm:$0xf] %v305
                %v307 = vld [vmem:[%s303 + $0x8] sm:$0xf]
                %308 = vst [vmem:[%s304 + $0x4] sm:$0xf] %v307
                %v309 = vld [vmem:[%s303 + $0x10] sm:$0xf]
                %310 = vst [vmem:[%s304 + $0x8] sm:$0xf] %v309
                %v311 = vld [vmem:[%s303 + $0x18] sm:$0xf]
                %312 = vst [vmem:[%s304 + $0xc] sm:$0xf] %v311
              $region69: #{tpu_custom_call.1} parent=63 // loop_footer
                %s302 = sadd.s32 1, %s298
              $region70: #{tpu_custom_call.1} parent=63 // loop_footer_branch
                %297 = sbr.rel target = $region66
              $region71: #{tpu_custom_call.1} parent=63 // loop_exit
                _
            $region64: #{tpu_custom_call.1} parent=55 // pred_fallthru
              _
          $region56: #{tpu_custom_call.1} parent=51 // pred_fallthru
            _
          %340 = vnop
        $region52: #{tpu_custom_call.1} parent=47 // pred_fallthru
          _
      $region48: #{tpu_custom_call.1} parent=5 // pred_fallthru
        _
      %p341 = scmp.le.s32.totalorder 1, %s18
      %p342 = scmp.lt.s32.totalorder %s18, 3
      %p343 = pnand %p341, %p342
      %p344 = pneg %p343
      // Predicated region
      $region90: #{tpu_custom_call.1} parent=5 // pred_check
        _
      $region91: #{tpu_custom_call.1} parent=5 // pred_check_branch
        %346 = sbr.rel (%p343) target = $region93
      $region92: #{tpu_custom_call.1} parent=5 // pred_region
        %s347 = ssub.s32 %s18, 1
        %s348 = sand.u32 %s31, 1
        %s349 = sand.u32 %s31, 1
        %s350 = smul.addr %s349, 16
        %s351 = scalar_lea.vmem [#allocation2], %s350
        // Predicated region
        $region94: #{tpu_custom_call.1} parent=92 // pred_check
          %p352 = pneg %p44
        $region95: #{tpu_custom_call.1} parent=92 // pred_check_branch
          %354 = sbr.rel (%p352) target = $region97
        $region96: #{tpu_custom_call.1} parent=92 // pred_region
          _
        $region97: #{tpu_custom_call.1} parent=92 // pred_fallthru
          _
        %s355 = sand.u32 %s31, 1
        %s356 = sand.u32 %s31, 1
        %s357 = smul.addr %s356, 16
        %s358 = scalar_lea.vmem [#allocation2], %s357
        %p359 = pneg %p44
        %p360 = pneg %p41
        %p361 = pneg %p65
        %p362 = pneg %p62
        %p363 = pneg %p86
        %p364 = pneg %p83
        %p365 = pneg %p107
        %p366 = pneg %p104
        %p367 = pneg %p128
        %p368 = pneg %p125
        %p369 = pneg %p149
        %p370 = pneg %p146
        %p371 = pneg %p170
        %p372 = pneg %p167
        %p373 = pneg %p191
        %p374 = pneg %p188
        %p375 = pneg %p212
        %p376 = pneg %p209
        %p377 = pneg %p238
        %p378 = pneg %p235
        %s379 = sand.u32 %s225, 1
        %s380 = scalar_lea.sflag [#allocation4], %s379
        %s381 = sand.u32 %s225, 1
        %s382 = smul.addr %s381, 32
        %s383 = scalar_lea.vmem [#allocation3], %s382
        %v385 = vld [vmem:[%s351] sm:$0xf]
        %v386 = vld [vmem:[%s351 + $0x4] sm:$0xf]
        %v387 = vld [vmem:[%s351 + $0x8] sm:$0xf]
        %v388 = vld [vmem:[%s351 + $0xc] sm:$0xf]
        %v389 = vld [vmem:[%s1] sm:$0xf]
        %v390 = vld [vmem:[%s1 + $0x4] sm:$0xf]
        %v391 = vld [vmem:[%s2] sm:$0xff]
        %v392 = vld [vmem:[%s2 + $0x8] sm:$0xff]
        %394 = vset.pattern.permute.xlu0 0
        %395 = vperm.xlu0 %394, %v391
        %v396 = vpop.permute.xlu0 %395
        %399 = vset.pattern.permute.xlu0 0
        %400 = vperm.xlu0 %399, %v392
        %v401 = vpop.permute.xlu0 %400
        %v405 = vunpack.c.l.b16 %v389
        %v406 = vunpack.c.l.b16 %v390
        %v407 = vpack.c.b16 %v406, %v405
        %v412 = vunpack.c.l.b16 %v385
        %v413 = vunpack.c.l.b16 %v386
        %v414 = vunpack.c.l.b16 %v387
        %v415 = vunpack.c.l.b16 %v388
        %v416 = vpack.c.b16 %v413, %v412
        %v417 = vpack.c.b16 %v415, %v414
        %vm420 = vcmask 261120
        %v422 = vsel %vm420, %v407, 0
        %424 = vmatprep.subr.bf16.mxu0 0
        %425 = vmatpush1.bf16.msra.mxu0 %v416
        %426 = vmatprep.subr.bf16.mxu0 0
        %427 = vmatpush1.bf16.msra.mxu0 %v417
        %428 = vmatprep.subr.bf16.mxu0 0
        %429 = vmatpush1.bf16.msra.mxu0 0
        %430 = vmatprep.subr.bf16.mxu0 0
        %431 = vmatpush1.bf16.msra.mxu0 0
        %432 = vmatprep.subr.bf16.mxu0 0
        %433 = vmatpush1.bf16.msra.mxu0 0
        %434 = vmatprep.subr.bf16.mxu0 0
        %435 = vmatpush1.bf16.msra.mxu0 0
        %436 = vmatprep.subr.bf16.mxu0 0
        %437 = vmatpush1.bf16.msra.mxu0 0
        %438 = vmatprep.subr.bf16.mxu0 0
        %439 = vmatpush1.bf16.msra.mxu0 0
        %440 = vmatprep.subr.bf16.mxu0 0
        %441 = vmatpush1.bf16.msra.mxu0 0
        %442 = vmatprep.subr.bf16.mxu0 0
        %443 = vmatpush1.bf16.msra.mxu0 0
        %444 = vmatprep.subr.bf16.mxu0 0
        %445 = vmatpush1.bf16.msra.mxu0 0
        %446 = vmatprep.subr.bf16.mxu0 0
        %447 = vmatpush1.bf16.msra.mxu0 0
        %448 = vmatprep.subr.bf16.mxu0 0
        %449 = vmatpush1.bf16.msra.mxu0 0
        %450 = vmatprep.subr.bf16.mxu0 0
        %451 = vmatpush1.bf16.msra.mxu0 0
        %452 = vmatprep.subr.bf16.mxu0 0
        %453 = vmatpush1.bf16.msra.mxu0 0
        %454 = vmatprep.subr.bf16.mxu0 0
        %455 = vmatpush1.bf16.msra.mxu0 0
        %456 = vmatprep.mubr.bf16.mxu0 0
        %457 = vmatmul.mubr.bf16.gmra.mrb[0].mxu0 %v422
        %v458 = vpop.f32.mrb[0].mxu0
        %v459 = vadd.f32 %v396, %v458
        %v460 = vpop.f32.mrb[0].mxu0
        %v461 = vpop.f32.mrb[0].mxu0
        %v462 = vadd.f32 %v401, %v461
        %v463 = vpop.f32.mrb[0].mxu0
        %464 = vdwg.mxu0
        %v465 = vtanh.pop %v459
        %v466 = vtanh.pop %v462
        %v467 = vpack.c.bf16 %v466, %v465
        %v468 = vld [vmem:[%s3] sm:$0xf]
        %v469 = vld [vmem:[%s4] sm:$0xff]
        %471 = vset.pattern.permute.xlu0 0
        %472 = vperm.xlu0 %471, %v469
        %v473 = vpop.permute.xlu0 %472
        %vm475 = vcmask 130048
        %v477 = vsel %vm475, %v468, 0
        %479 = vmatprep.subr.bf16.mxu0 0
        %480 = vmatpush1.bf16.msra.mxu0 %v467
        %481 = vmatprep.subr.bf16.mxu0 0
        %482 = vmatpush1.bf16.msra.mxu0 0
        %483 = vmatprep.subr.bf16.mxu0 0
        %484 = vmatpush1.bf16.msra.mxu0 0
        %485 = vmatprep.subr.bf16.mxu0 0
        %486 = vmatpush1.bf16.msra.mxu0 0
        %487 = vmatprep.subr.bf16.mxu0 0
        %488 = vmatpush1.bf16.msra.mxu0 0
        %489 = vmatprep.subr.bf16.mxu0 0
        %490 = vmatpush1.bf16.msra.mxu0 0
        %491 = vmatprep.subr.bf16.mxu0 0
        %492 = vmatpush1.bf16.msra.mxu0 0
        %493 = vmatprep.subr.bf16.mxu0 0
        %494 = vmatpush1.bf16.msra.mxu0 0
        %495 = vmatprep.subr.bf16.mxu0 0
        %496 = vmatpush1.bf16.msra.mxu0 0
        %497 = vmatprep.subr.bf16.mxu0 0
        %498 = vmatpush1.bf16.msra.mxu0 0
        %499 = vmatprep.subr.bf16.mxu0 0
        %500 = vmatpush1.bf16.msra.mxu0 0
        %501 = vmatprep.subr.bf16.mxu0 0
        %502 = vmatpush1.bf16.msra.mxu0 0
        %503 = vmatprep.subr.bf16.mxu0 0
        %504 = vmatpush1.bf16.msra.mxu0 0
        %505 = vmatprep.subr.bf16.mxu0 0
        %506 = vmatpush1.bf16.msra.mxu0 0
        %507 = vmatprep.subr.bf16.mxu0 0
        %508 = vmatpush1.bf16.msra.mxu0 0
        %509 = vmatprep.subr.bf16.mxu0 0
        %510 = vmatpush1.bf16.msra.mxu0 0
        %511 = vmatprep.mubr.bf16.mxu0 0
        %512 = vmatmul.mubr.bf16.gmra.mrb[0].mxu0 %v477
        %v513 = vpop.f32.mrb[0].mxu0
        %v514 = vadd.f32 %v473, %v513
        %v515 = vpop.f32.mrb[0].mxu0
        %v516 = vpop.f32.mrb[0].mxu0
        %v517 = vpop.f32.mrb[0].mxu0
        %518 = vdwg.mxu0
        %v519 = vtanh.pop %v514
        %v520 = vpack.c.bf16 %v519, %v519
        %v521 = vld [vmem:[%s5] sm:$0xf]
        %v522 = vld [vmem:[%s5 + $0x4] sm:$0xf]
        %v523 = vld [vmem:[%s6] sm:$0xff]
        %v524 = vld [vmem:[%s6 + $0x8] sm:$0xff]
        %526 = vset.pattern.permute.xlu0 0
        %527 = vperm.xlu0 %526, %v523
        %v528 = vpop.permute.xlu0 %527
        %531 = vset.pattern.permute.xlu0 0
        %532 = vperm.xlu0 %531, %v524
        %v533 = vpop.permute.xlu0 %532
        %v537 = vunpack.c.l.b16 %v521
        %v538 = vunpack.c.l.b16 %v522
        %v539 = vpack.c.b16 %v538, %v537
        %vm540 = vcmask 64512
        %v542 = vsel %vm540, %v539, 0
        %vm544 = vcmask 1043456
        %v546 = vsel %vm544, %v520, 0
        %548 = vmatprep.subr.bf16.mxu0 0
        %549 = vmatpush1.bf16.msra.mxu0 %v546
        %550 = vmatprep.subr.bf16.mxu0 0
        %551 = vmatpush1.bf16.msra.mxu0 0
        %552 = vmatprep.subr.bf16.mxu0 0
        %553 = vmatpush1.bf16.msra.mxu0 0
        %554 = vmatprep.subr.bf16.mxu0 0
        %555 = vmatpush1.bf16.msra.mxu0 0
        %556 = vmatprep.subr.bf16.mxu0 0
        %557 = vmatpush1.bf16.msra.mxu0 0
        %558 = vmatprep.subr.bf16.mxu0 0
        %559 = vmatpush1.bf16.msra.mxu0 0
        %560 = vmatprep.subr.bf16.mxu0 0
        %561 = vmatpush1.bf16.msra.mxu0 0
        %562 = vmatprep.subr.bf16.mxu0 0
        %563 = vmatpush1.bf16.msra.mxu0 0
        %564 = vmatprep.subr.bf16.mxu0 0
        %565 = vmatpush1.bf16.msra.mxu0 0
        %566 = vmatprep.subr.bf16.mxu0 0
        %567 = vmatpush1.bf16.msra.mxu0 0
        %568 = vmatprep.subr.bf16.mxu0 0
        %569 = vmatpush1.bf16.msra.mxu0 0
        %570 = vmatprep.subr.bf16.mxu0 0
        %571 = vmatpush1.bf16.msra.mxu0 0
        %572 = vmatprep.subr.bf16.mxu0 0
        %573 = vmatpush1.bf16.msra.mxu0 0
        %574 = vmatprep.subr.bf16.mxu0 0
        %575 = vmatpush1.bf16.msra.mxu0 0
        %576 = vmatprep.subr.bf16.mxu0 0
        %577 = vmatpush1.bf16.msra.mxu0 0
        %578 = vmatprep.subr.bf16.mxu0 0
        %579 = vmatpush1.bf16.msra.mxu0 0
        %580 = vmatprep.mubr.bf16.mxu0 0
        %581 = vmatmul.mubr.bf16.gmra.mrb[0].mxu0 %v542
        %v582 = vpop.f32.mrb[0].mxu0
        %v583 = vadd.f32 %v528, %v582
        %v584 = vpop.f32.mrb[0].mxu0
        %v585 = vpop.f32.mrb[0].mxu0
        %v586 = vadd.f32 %v533, %v585
        %v587 = vpop.f32.mrb[0].mxu0
        %588 = vdwg.mxu0
        %v589 = vtanh.pop %v583
        %v590 = vtanh.pop %v586
        %v591 = vpack.c.bf16 %v590, %v589
        %v592 = vld [vmem:[%s7] sm:$0xf]
        %v593 = vld [vmem:[%s7 + $0x4] sm:$0xf]
        %v594 = vld [vmem:[%s7 + $0x8] sm:$0xf]
        %v595 = vld [vmem:[%s7 + $0xc] sm:$0xf]
        %v596 = vld [vmem:[%s8] sm:$0xff]
        %v597 = vld [vmem:[%s8 + $0x8] sm:$0xff]
        %v598 = vld [vmem:[%s8 + $0x10] sm:$0xff]
        %v599 = vld [vmem:[%s8 + $0x18] sm:$0xff]
        %601 = vset.pattern.permute.xlu0 0
        %602 = vperm.xlu0 %601, %v596
        %v603 = vpop.permute.xlu0 %602
        %606 = vset.pattern.permute.xlu0 0
        %607 = vperm.xlu0 %606, %v597
        %v608 = vpop.permute.xlu0 %607
        %611 = vset.pattern.permute.xlu0 0
        %612 = vperm.xlu0 %611, %v598
        %v613 = vpop.permute.xlu0 %612
        %616 = vset.pattern.permute.xlu0 0
        %617 = vperm.xlu0 %616, %v599
        %v618 = vpop.permute.xlu0 %617
        %v624 = vunpack.c.l.b16 %v592
        %v625 = vunpack.c.l.b16 %v593
        %v626 = vunpack.c.l.b16 %v594
        %v627 = vunpack.c.l.b16 %v595
        %v628 = vpack.c.b16 %v625, %v624
        %v629 = vpack.c.b16 %v627, %v626
        %v631 = vsel %vm475, %v628, 0
        %v634 = vsel %vm475, %v629, 0
        %636 = vmatprep.subr.bf16.mxu0 0
        %637 = vmatpush1.bf16.msra.mxu0 %v591
        %638 = vmatprep.subr.bf16.mxu0 0
        %639 = vmatpush1.bf16.msra.mxu0 0
        %640 = vmatprep.subr.bf16.mxu0 0
        %641 = vmatpush1.bf16.msra.mxu0 0
        %642 = vmatprep.subr.bf16.mxu0 0
        %643 = vmatpush1.bf16.msra.mxu0 0
        %644 = vmatprep.subr.bf16.mxu0 0
        %645 = vmatpush1.bf16.msra.mxu0 0
        %646 = vmatprep.subr.bf16.mxu0 0
        %647 = vmatpush1.bf16.msra.mxu0 0
        %648 = vmatprep.subr.bf16.mxu0 0
        %649 = vmatpush1.bf16.msra.mxu0 0
        %650 = vmatprep.subr.bf16.mxu0 0
        %651 = vmatpush1.bf16.msra.mxu0 0
        %652 = vmatprep.subr.bf16.mxu0 0
        %653 = vmatpush1.bf16.msra.mxu0 0
        %654 = vmatprep.subr.bf16.mxu0 0
        %655 = vmatpush1.bf16.msra.mxu0 0
        %656 = vmatprep.subr.bf16.mxu0 0
        %657 = vmatpush1.bf16.msra.mxu0 0
        %658 = vmatprep.subr.bf16.mxu0 0
        %659 = vmatpush1.bf16.msra.mxu0 0
        %660 = vmatprep.subr.bf16.mxu0 0
        %661 = vmatpush1.bf16.msra.mxu0 0
        %662 = vmatprep.subr.bf16.mxu0 0
        %663 = vmatpush1.bf16.msra.mxu0 0
        %664 = vmatprep.subr.bf16.mxu0 0
        %665 = vmatpush1.bf16.msra.mxu0 0
        %666 = vmatprep.subr.bf16.mxu0 0
        %667 = vmatpush1.bf16.msra.mxu0 0
        %668 = vmatprep.mubr.bf16.mxu0 0
        %669 = vmatmul.mubr.bf16.gmra.mrb[0].mxu0 %v631
        %v670 = vpop.f32.mrb[0].mxu0
        %v671 = vadd.f32 %v603, %v670
        %v672 = vpop.f32.mrb[0].mxu0
        %v673 = vpop.f32.mrb[0].mxu0
        %v674 = vadd.f32 %v608, %v673
        %v675 = vpop.f32.mrb[0].mxu0
        %676 = vmatprep.mubr.bf16.mxu0 0
        %677 = vmatmul.mubr.bf16.gmra.mrb[0].mxu0 %v634
        %v678 = vpop.f32.mrb[0].mxu0
        %v679 = vadd.f32 %v613, %v678
        %v680 = vpop.f32.mrb[0].mxu0
        %v681 = vpop.f32.mrb[0].mxu0
        %v682 = vadd.f32 %v618, %v681
        %v683 = vpop.f32.mrb[0].mxu0
        %684 = vdwg.mxu0
        %685 = vst [vmem:[%s383] sm:$0xff] %v671
        %686 = vst [vmem:[%s383 + $0x8] sm:$0xff] %v674
        %687 = vst [vmem:[%s383 + $0x10] sm:$0xff] %v679
        %688 = vst [vmem:[%s383 + $0x18] sm:$0xff] %v682
        %s689 = sand.u32 %s225, 1
        %s690 = scalar_lea.sflag [#allocation4], %s689
        %s691 = sand.u32 %s225, 1
        %s692 = smul.addr %s691, 32
        %s693 = scalar_lea.vmem [#allocation3], %s692
        // Predicated region
        $region98: #{tpu_custom_call.1} parent=92 // pred_check
          %p694 = pneg %p235
        $region99: #{tpu_custom_call.1} parent=92 // pred_check_branch
          %696 = sbr.rel (%p694) target = $region101
        $region100: #{tpu_custom_call.1} parent=92 // pred_region
          %s698 = ssub.s32 512, 512
          %699 = vsyncadd %s690, %s698
          %s700 = smul.addr %s23, 128
          %s701 = scalar_lea.hbm %s9, %s700
          %s702 = sshll.u32 %s693, 4
          %s703 = int_to_ptr.vmem [resolvable:$true] %s702
          %708 = dma.vmem_to_hbm [thread:$0]  %s703, 512, %s701, %s690, 128, 256, 8
        $region101: #{tpu_custom_call.1} parent=92 // pred_fallthru
          _
      $region93: #{tpu_custom_call.1} parent=5 // pred_fallthru
        _
      %p709 = scmp.le.s32.totalorder 2, %s18
      // Predicated region
      $region102: #{tpu_custom_call.1} parent=5 // pred_check
        %p710 = pneg %p709
      $region103: #{tpu_custom_call.1} parent=5 // pred_check_branch
        %712 = sbr.rel (%p710) target = $region105
      $region104: #{tpu_custom_call.1} parent=5 // pred_region
        %s713 = ssub.s32 %s18, 2
        // Predicated region
        $region106: #{tpu_custom_call.1} parent=104 // pred_check
          %p714 = pneg %p241
        $region107: #{tpu_custom_call.1} parent=104 // pred_check_branch
          %716 = sbr.rel (%p714) target = $region109
        $region108: #{tpu_custom_call.1} parent=104 // pred_region
          %s717 = sand.u32 %s226, 1
          %s718 = scalar_lea.sflag [#allocation4], %s717
          %s719 = sand.u32 %s226, 1
          %s720 = smul.addr %s719, 32
          %s721 = scalar_lea.vmem [#allocation3], %s720
          %722 = dma.done %s718, 512
        $region109: #{tpu_custom_call.1} parent=104 // pred_fallthru
          _
      $region105: #{tpu_custom_call.1} parent=5 // pred_fallthru
        _
    $region6: #{tpu_custom_call.1} parent=1 // loop_footer
      %s22 = sadd.s32 1, %s18
    $region7: #{tpu_custom_call.1} parent=1 // loop_footer_branch
      %17 = sbr.rel target = $region3
    $region8: #{tpu_custom_call.1} parent=1 // loop_exit
      _
    %723 = vsyncpa [#allocation4], 1
    %s724 = scalar_lea.sflag [#allocation4], 1
    %725 = vsyncpa %s724, 1

</llo_original>
